<compile_context>
chip_gen: v6e
topology: v6e:2x2x1
jax: 0.10.0
libtpu: 0.0.40
codegen_flags: <defaults>
</compile_context>

<pallas_src>
import functools

import jax
import jax.numpy as jnp
from jax.experimental import pallas as pl
from jax.experimental.pallas import tpu as pltpu


def _round_up(n, m):
    return ((n + m - 1) // m) * m


def _cdiv(a, b):
    return -(-a // b)


def _pad2d(a, shape):
    return jnp.pad(a, ((0, shape[0] - a.shape[0]), (0, shape[1] - a.shape[1])))


def mlp_kernel(x_ref, w1_ref, b1_ref, w2_ref, b2_ref, w3_ref, b3_ref, o_ref):
    # One (tm, in_dim) slab of the batch per grid step; weights/biases use a
    # constant index_map so they stay resident in VMEM across the whole grid.
    x = x_ref[...]                                   # bf16 (tm, in_dim)

    h1 = jnp.dot(x, w1_ref[...], preferred_element_type=jnp.float32) + b1_ref[...]
    h1 = jnp.maximum(h1, 0.0).astype(jnp.bfloat16)   # ReLU in f32, cast for MXU

    h2 = jnp.dot(h1, w2_ref[...], preferred_element_type=jnp.float32) + b2_ref[...]
    h2 = jnp.maximum(h2, 0.0).astype(jnp.bfloat16)

    y = jnp.dot(h2, w3_ref[...], preferred_element_type=jnp.float32) + b3_ref[...]
    o_ref[...] = y.astype(o_ref.dtype)               # bf16, lane-dense (128) store


@functools.partial(jax.jit, static_argnames=("tile_m",))
def mlp_forward_pallas(x, params, tile_m=2048):
    """x: arbitrary-rank array with leading batch dim. Returns (batch, output_dim) f32."""
    w1, b1, w2, b2, w3, b3 = params
    batch = x.shape[0]
    out_dim = w3.shape[1]

    # Matches x.view(batch, -1).float(); cast straight to bf16 MXU operand
    # (no intermediate f32 materialization, no full-array zero-init copy).
    x2d = x.reshape(batch, -1).astype(jnp.bfloat16)
    in_dim = x2d.shape[1]

    # Lane-align hidden / output feature dims (zero padding is exact:
    # relu(0)=0 through zero weight rows/cols). 100->128, 50->128, 10->128.
    h1_p = _round_up(w1.shape[1], 128)
    h2_p = _round_up(w2.shape[1], 128)
    out_p = _round_up(out_dim, 128)

    # --- Batch tiling ------------------------------------------------------
    # Big tiles amortize the ~0.35us per-grid-step overhead; once there is
    # enough work, force >= 2 tiles so both v7x TensorCores get a share.
    # Tile is derived from cdiv(batch, n_tiles) rounded to the 16-row bf16
    # sublane quantum, so padding waste is bounded by ~n_tiles*16 rows.
    SUBLANE = 16
    batch_q = _round_up(batch, SUBLANE)
    n_tiles = max(_cdiv(batch_q, tile_m), 2 if batch_q >= 1024 else 1)
    tm = _round_up(_cdiv(batch_q, n_tiles), SUBLANE)
    batch_p = n_tiles * tm

    if batch_p != batch:
        x2d = jnp.pad(x2d, ((0, batch_p - batch), (0, 0)))

    w1p = _pad2d(w1, (in_dim, h1_p)).astype(jnp.bfloat16)
    b1p = _pad2d(b1, (1, h1_p)).astype(jnp.float32)
    w2p = _pad2d(w2, (h1_p, h2_p)).astype(jnp.bfloat16)
    b2p = _pad2d(b2, (1, h2_p)).astype(jnp.float32)
    w3p = _pad2d(w3, (h2_p, out_p)).astype(jnp.bfloat16)
    b3p = _pad2d(b3, (1, out_p)).astype(jnp.float32)

    grid = (n_tiles,)

    def _resident(shape):
        # weights/biases: same block every grid step -> stay in VMEM
        return pl.BlockSpec(shape, lambda i: (0, 0))

    flops = 2 * batch_p * (in_dim * h1_p + h1_p * h2_p + h2_p * out_p)
    bytes_accessed = (
        x2d.size * 2
        + (w1p.size + w2p.size + w3p.size) * 2
        + (b1p.size + b2p.size + b3p.size) * 4
        + batch_p * out_p * 2                        # bf16 output stream
    )

    out = pl.pallas_call(
        mlp_kernel,
        out_shape=jax.ShapeDtypeStruct((batch_p, out_p), jnp.bfloat16),
        grid=grid,
        in_specs=[
            pl.BlockSpec((tm, in_dim), lambda i: (i, 0)),
            _resident(w1p.shape), _resident(b1p.shape),
            _resident(w2p.shape), _resident(b2p.shape),
            _resident(w3p.shape), _resident(b3p.shape),
        ],
        out_specs=pl.BlockSpec((tm, out_p), lambda i: (i, 0)),
        compiler_params=pltpu.CompilerParams(
            dimension_semantics=("parallel",),
            vmem_limit_bytes=32 * 1024 * 1024,       # headroom vs v5e's 16 MiB default
        ),
        cost_estimate=pl.CostEstimate(
            flops=flops, transcendentals=0, bytes_accessed=bytes_accessed),
    )(x2d, w1p, b1p, w2p, b2p, w3p, b3p)

    # Drop padded rows / lanes; return f32 like the PyTorch module (.float() input).
    return out[:batch, :out_dim].astype(jnp.float32)


@jax.jit
def _mlp_xla(x, params):
    """Plain-XLA fast path (tiny batches: launch/pad overhead > work)."""
    w1, b1, w2, b2, w3, b3 = params
    x2d = x.reshape(x.shape[0], -1).astype(jnp.float32)
    h1 = jax.nn.relu(x2d @ w1 + b1)
    h2 = jax.nn.relu(h1 @ w2 + b2)
    return h2 @ w3 + b3


def mlp_forward(x, params, tile_m=2048, min_pallas_batch=512):
    """Dispatcher: Pallas kernel at throughput-scale batches, XLA below."""
    if x.shape[0] < min_pallas_batch:
        return _mlp_xla(x, params)
    return mlp_forward_pallas(x, params, tile_m=tile_m)


def init_params(key, input_dim, output_dim):
    """Deterministic init mirroring nn.Linear shapes (stored transposed: (in, out))."""
    dims = [(input_dim, 100), (100, 50), (50, output_dim)]
    params = []
    for i, (fan_in, fan_out) in enumerate(dims):
        kw, kb, key = jax.random.split(jax.random.fold_in(key, i), 3)
        bound = 1.0 / jnp.sqrt(float(fan_in))
        w = jax.random.uniform(kw, (fan_in, fan_out), jnp.float32, -bound, bound)
        b = jax.random.uniform(kb, (1, fan_out), jnp.float32, -bound, bound)
        params += [w, b]
    return tuple(params)


def mlp_reference(x, params):
    """Pure-f32 reference of the PyTorch forward."""
    w1, b1, w2, b2, w3, b3 = params
    x2d = x.reshape(x.shape[0], -1).astype(jnp.float32)
    h1 = jax.nn.relu(x2d @ w1 + b1)
    h2 = jax.nn.relu(h1 @ w2 + b2)
    return h2 @ w3 + b3


if __name__ == "__main__":
    key = jax.random.PRNGKey(0)
    kx, kx2, kp = jax.random.split(key, 3)

    # Small input consistent with the forward: anything that flattens per-example.
    batch, c, s = 2, 4, 16            # x.view(batch, -1) -> input_dim = 4 * 16 = 64
    input_dim, output_dim = c * s, 10
    params = init_params(kp, input_dim, output_dim)

    # --- Pallas path, tiny batch (single 16-row tile) ---
    x = jax.random.normal(kx, (batch, c, s), jnp.float32)
    y = jax.block_until_ready(mlp_forward_pallas(x, params))
    y_ref = mlp_reference(x, params)
    assert y.shape == (batch, output_dim)
    # bf16 MXU operands / bf16 output store with f32 accumulation -> loose tolerance.
    assert jnp.allclose(y, y_ref, atol=5e-2, rtol=5e-2), "mismatch vs reference (small)"

    # --- Pallas path, multi-tile grid with a ragged remainder (batch=300, tm<=128) ---
    batch2 = 300
    x2 = jax.random.normal(kx2, (batch2, c, s), jnp.float32)
    y2 = jax.block_until_ready(mlp_forward_pallas(x2, params, tile_m=128))
    y2_ref = mlp_reference(x2, params)
    assert y2.shape == (batch2, output_dim)
    assert jnp.allclose(y2, y2_ref, atol=5e-2, rtol=5e-2), "mismatch vs reference (multi-tile)"

    # --- Dispatcher fast path (tiny batch -> plain XLA) ---
    y3 = jax.block_until_ready(mlp_forward(x, params))
    assert jnp.allclose(y3, y_ref, atol=1e-5, rtol=1e-5), "mismatch vs reference (fast path)"

    print("KERNEL_OK")
</pallas_src>

<mosaic_0001>
module attributes {stable_mosaic.version = 11 : i64} {
  func.func @mlp_kernel(%arg0: i32, %arg1: memref<16x64xbf16, #tpu.memory_space<vmem>>, %arg2: memref<64x128xbf16, #tpu.memory_space<vmem>>, %arg3: memref<1x128xf32, #tpu.memory_space<vmem>>, %arg4: memref<128x128xbf16, #tpu.memory_space<vmem>>, %arg5: memref<1x128xf32, #tpu.memory_space<vmem>>, %arg6: memref<128x128xbf16, #tpu.memory_space<vmem>>, %arg7: memref<1x128xf32, #tpu.memory_space<vmem>>, %arg8: memref<16x128xbf16, #tpu.memory_space<vmem>>) attributes {dimension_semantics = [#tpu.dimension_semantics<parallel>], iteration_bounds = array<i64: 1>, scalar_prefetch = 0 : i64, scratch_operands = 0 : i64, tpu.core_type = #tpu.core_type<tc>, window_params = [{transform_indices = @transform_0, window_bounds = array<i64: 16, 64>}, {pipeline_mode = #tpu.pipeline_mode<synchronous>, transform_indices = @transform_1, window_bounds = array<i64: 64, 128>}, {pipeline_mode = #tpu.pipeline_mode<synchronous>, transform_indices = @transform_2, window_bounds = array<i64: 1, 128>}, {pipeline_mode = #tpu.pipeline_mode<synchronous>, transform_indices = @transform_3, window_bounds = array<i64: 128, 128>}, {pipeline_mode = #tpu.pipeline_mode<synchronous>, transform_indices = @transform_4, window_bounds = array<i64: 1, 128>}, {pipeline_mode = #tpu.pipeline_mode<synchronous>, transform_indices = @transform_5, window_bounds = array<i64: 128, 128>}, {pipeline_mode = #tpu.pipeline_mode<synchronous>, transform_indices = @transform_6, window_bounds = array<i64: 1, 128>}, {transform_indices = @transform_7, window_bounds = array<i64: 16, 128>}]} {
    %c0 = arith.constant 0 : index
    %c0_0 = arith.constant 0 : index
    %0 = vector.load %arg1[%c0, %c0_0] : memref<16x64xbf16, #tpu.memory_space<vmem>>, vector<16x64xbf16>
    %c0_1 = arith.constant 0 : index
    %c0_2 = arith.constant 0 : index
    %1 = vector.load %arg2[%c0_1, %c0_2] : memref<64x128xbf16, #tpu.memory_space<vmem>>, vector<64x128xbf16>
    %cst = arith.constant dense<0.000000e+00> : vector<16x128xf32>
    %2 = tpu.matmul %0, %1, %cst {dimension_numbers = #tpu.dot_dimension_numbers<[1], [0], [0], [1], [0, 0, 1, 1], [], []>} : vector<16x64xbf16>, vector<64x128xbf16>, vector<16x128xf32> -> vector<16x128xf32>
    %c0_3 = arith.constant 0 : index
    %c0_4 = arith.constant 0 : index
    %3 = vector.load %arg3[%c0_3, %c0_4] : memref<1x128xf32, #tpu.memory_space<vmem>>, vector<1x128xf32>
    %4 = vector.broadcast %3 : vector<1x128xf32> to vector<16x128xf32>
    %5 = arith.addf %2, %4 : vector<16x128xf32>
    %cst_5 = arith.constant 0.000000e+00 : f32
    %6 = vector.broadcast %cst_5 : f32 to vector<16x128xf32>
    %7 = arith.maximumf %5, %6 : vector<16x128xf32>
    %8 = arith.truncf %7 : vector<16x128xf32> to vector<16x128xbf16>
    %c0_6 = arith.constant 0 : index
    %c0_7 = arith.constant 0 : index
    %9 = vector.load %arg4[%c0_6, %c0_7] : memref<128x128xbf16, #tpu.memory_space<vmem>>, vector<128x128xbf16>
    %cst_8 = arith.constant dense<0.000000e+00> : vector<16x128xf32>
    %10 = tpu.matmul %8, %9, %cst_8 {dimension_numbers = #tpu.dot_dimension_numbers<[1], [0], [0], [1], [0, 0, 1, 1], [], []>} : vector<16x128xbf16>, vector<128x128xbf16>, vector<16x128xf32> -> vector<16x128xf32>
    %c0_9 = arith.constant 0 : index
    %c0_10 = arith.constant 0 : index
    %11 = vector.load %arg5[%c0_9, %c0_10] : memref<1x128xf32, #tpu.memory_space<vmem>>, vector<1x128xf32>
    %12 = vector.broadcast %11 : vector<1x128xf32> to vector<16x128xf32>
    %13 = arith.addf %10, %12 : vector<16x128xf32>
    %cst_11 = arith.constant 0.000000e+00 : f32
    %14 = vector.broadcast %cst_11 : f32 to vector<16x128xf32>
    %15 = arith.maximumf %13, %14 : vector<16x128xf32>
    %16 = arith.truncf %15 : vector<16x128xf32> to vector<16x128xbf16>
    %c0_12 = arith.constant 0 : index
    %c0_13 = arith.constant 0 : index
    %17 = vector.load %arg6[%c0_12, %c0_13] : memref<128x128xbf16, #tpu.memory_space<vmem>>, vector<128x128xbf16>
    %cst_14 = arith.constant dense<0.000000e+00> : vector<16x128xf32>
    %18 = tpu.matmul %16, %17, %cst_14 {dimension_numbers = #tpu.dot_dimension_numbers<[1], [0], [0], [1], [0, 0, 1, 1], [], []>} : vector<16x128xbf16>, vector<128x128xbf16>, vector<16x128xf32> -> vector<16x128xf32>
    %c0_15 = arith.constant 0 : index
    %c0_16 = arith.constant 0 : index
    %19 = vector.load %arg7[%c0_15, %c0_16] : memref<1x128xf32, #tpu.memory_space<vmem>>, vector<1x128xf32>
    %20 = vector.broadcast %19 : vector<1x128xf32> to vector<16x128xf32>
    %21 = arith.addf %18, %20 : vector<16x128xf32>
    %22 = arith.truncf %21 : vector<16x128xf32> to vector<16x128xbf16>
    %c0_17 = arith.constant 0 : index
    %c0_18 = arith.constant 0 : index
    %23 = vector.load %arg8[%c0_17, %c0_18] : memref<16x128xbf16, #tpu.memory_space<vmem>>, vector<16x128xbf16>
    tpu.vector_store %arg8[%c0_17, %c0_18], %22 {strides = array<i32>} : memref<16x128xbf16, #tpu.memory_space<vmem>>, vector<16x128xbf16>,
    return
  }
  func.func @transform_0(%arg0: i32) -> (i32, i32) {
    %c0_i32 = arith.constant 0 : i32
    %c0_i32_0 = arith.constant 0 : i32
    return %arg0, %c0_i32 : i32, i32
  }
  func.func @transform_1(%arg0: i32) -> (i32, i32) {
    %c0_i32 = arith.constant 0 : i32
    %c0_i32_0 = arith.constant 0 : i32
    %c0_i32_1 = arith.constant 0 : i32
    return %c0_i32, %c0_i32_0 : i32, i32
  }
  func.func @transform_2(%arg0: i32) -> (i32, i32) {
    %c0_i32 = arith.constant 0 : i32
    %c0_i32_0 = arith.constant 0 : i32
    %c0_i32_1 = arith.constant 0 : i32
    return %c0_i32, %c0_i32_0 : i32, i32
  }
  func.func @transform_3(%arg0: i32) -> (i32, i32) {
    %c0_i32 = arith.constant 0 : i32
    %c0_i32_0 = arith.constant 0 : i32
    %c0_i32_1 = arith.constant 0 : i32
    return %c0_i32, %c0_i32_0 : i32, i32
  }
  func.func @transform_4(%arg0: i32) -> (i32, i32) {
    %c0_i32 = arith.constant 0 : i32
    %c0_i32_0 = arith.constant 0 : i32
    %c0_i32_1 = arith.constant 0 : i32
    return %c0_i32, %c0_i32_0 : i32, i32
  }
  func.func @transform_5(%arg0: i32) -> (i32, i32) {
    %c0_i32 = arith.constant 0 : i32
    %c0_i32_0 = arith.constant 0 : i32
    %c0_i32_1 = arith.constant 0 : i32
    return %c0_i32, %c0_i32_0 : i32, i32
  }
  func.func @transform_6(%arg0: i32) -> (i32, i32) {
    %c0_i32 = arith.constant 0 : i32
    %c0_i32_0 = arith.constant 0 : i32
    %c0_i32_1 = arith.constant 0 : i32
    return %c0_i32, %c0_i32_0 : i32, i32
  }
  func.func @transform_7(%arg0: i32) -> (i32, i32) {
    %c0_i32 = arith.constant 0 : i32
    %c0_i32_0 = arith.constant 0 : i32
    return %arg0, %c0_i32 : i32, i32
  }
}

</mosaic_0001>

<llo_original>
// kernel: mlp_forward_pallas.1
$region0: #{mlp_forward_pallas.1}
  #allocation0 [shape = 'u32[]', space=smem, size = 0x4, offset = 0x4, fixed_abs, tag = 'smem constant byte address 0x4 - core index']
  #allocation1 [shape = 'u32[144,128]{1,0:T(1,128)}', space=vmem, size = 0x12000, scoped, tag = 'internal scratch']
  %s0 = inlined_call_operand.vmem [shape: bf16[16,64], index: 0, kind: input, shape index: {}]
  %s1 = inlined_call_operand.vmem [shape: bf16[64,128], index: 1, kind: input, shape index: {}]
  %s2 = inlined_call_operand.vmem [shape: f32[1,128], index: 2, kind: input, shape index: {}]
  %s3 = inlined_call_operand.vmem [shape: bf16[128,128], index: 3, kind: input, shape index: {}]
  %s4 = inlined_call_operand.vmem [shape: f32[1,128], index: 4, kind: input, shape index: {}]
  %s5 = inlined_call_operand.vmem [shape: bf16[128,128], index: 5, kind: input, shape index: {}]
  %s6 = inlined_call_operand.vmem [shape: f32[1,128], index: 6, kind: input, shape index: {}]
  %s7 = inlined_call_operand.vmem [shape: bf16[16,128], index: 7, kind: output, shape index: {}]
  %s8 = sld [smem:[#allocation0]]
  $region38: #{mlp_forward_pallas.1} parent=0
    _
  %s10 = ssub.s32 1, %s8
  %s11 = scalar_select 0, %s10, %s8
  // Predicated region
  $region2: #{mlp_forward_pallas.1} parent=0 // pred_check
    _
  $region3: #{mlp_forward_pallas.1} parent=0 // pred_check_branch
    %13 = sbr.rel (0) target = $region5
  $region4: #{mlp_forward_pallas.1} parent=0 // pred_region
    _
  $region5: #{mlp_forward_pallas.1} parent=0 // pred_fallthru
    _
  // Predicated region
  $region6: #{mlp_forward_pallas.1} parent=0 // pred_check
    _
  $region7: #{mlp_forward_pallas.1} parent=0 // pred_check_branch
    %15 = sbr.rel (0) target = $region9
  $region8: #{mlp_forward_pallas.1} parent=0 // pred_region
    _
  $region9: #{mlp_forward_pallas.1} parent=0 // pred_fallthru
    _
  // Predicated region
  $region10: #{mlp_forward_pallas.1} parent=0 // pred_check
    _
  $region11: #{mlp_forward_pallas.1} parent=0 // pred_check_branch
    %17 = sbr.rel (0) target = $region13
  $region12: #{mlp_forward_pallas.1} parent=0 // pred_region
    _
  $region13: #{mlp_forward_pallas.1} parent=0 // pred_fallthru
    _
  // Predicated region
  $region14: #{mlp_forward_pallas.1} parent=0 // pred_check
    _
  $region15: #{mlp_forward_pallas.1} parent=0 // pred_check_branch
    %19 = sbr.rel (0) target = $region17
  $region16: #{mlp_forward_pallas.1} parent=0 // pred_region
    _
  $region17: #{mlp_forward_pallas.1} parent=0 // pred_fallthru
    _
  // Predicated region
  $region18: #{mlp_forward_pallas.1} parent=0 // pred_check
    _
  $region19: #{mlp_forward_pallas.1} parent=0 // pred_check_branch
    %21 = sbr.rel (0) target = $region21
  $region20: #{mlp_forward_pallas.1} parent=0 // pred_region
    _
  $region21: #{mlp_forward_pallas.1} parent=0 // pred_fallthru
    _
  // Predicated region
  $region22: #{mlp_forward_pallas.1} parent=0 // pred_check
    _
  $region23: #{mlp_forward_pallas.1} parent=0 // pred_check_branch
    %23 = sbr.rel (0) target = $region25
  $region24: #{mlp_forward_pallas.1} parent=0 // pred_region
    _
  $region25: #{mlp_forward_pallas.1} parent=0 // pred_fallthru
    _
  // Predicated region
  $region26: #{mlp_forward_pallas.1} parent=0 // pred_check
    _
  $region27: #{mlp_forward_pallas.1} parent=0 // pred_check_branch
    %25 = sbr.rel (0) target = $region29
  $region28: #{mlp_forward_pallas.1} parent=0 // pred_region
    _
  $region29: #{mlp_forward_pallas.1} parent=0 // pred_fallthru
    _
  %v27 = vld [vmem:[%s0] sm:$0xf]
  %v28 = vld [vmem:[%s0 + $0x4] sm:$0xf]
  %v29 = vld [vmem:[%s1] sm:$0xf]
  %v30 = vld [vmem:[%s1 + $0x4] sm:$0xf]
  %v31 = vld [vmem:[%s1 + $0x8] sm:$0xf]
  %v32 = vld [vmem:[%s1 + $0xc] sm:$0xf]
  %v33 = vld [vmem:[%s1 + $0x10] sm:$0xf]
  %v34 = vld [vmem:[%s1 + $0x14] sm:$0xf]
  %v35 = vld [vmem:[%s1 + $0x18] sm:$0xf]
  %v36 = vld [vmem:[%s1 + $0x1c] sm:$0xf]
  %v37 = vld [vmem:[%s2] sm:$0x1]
  %v39 = vlaneseq
  %v40 = vshrl.u32 %v39, 7
  %v41 = vsub.s32 0, %v40
  %v42 = vrot.slane %v37, %v41
  %v46 = vunpack.c.l.b16 %v27
  %v47 = vunpack.c.l.b16 %v28
  %v48 = vpack.c.b16 %v47, %v46
  %v57 = vunpack.c.l.b16 %v29
  %v58 = vunpack.c.l.b16 %v30
  %v59 = vunpack.c.l.b16 %v31
  %v60 = vunpack.c.l.b16 %v32
  %v61 = vunpack.c.l.b16 %v33
  %v62 = vunpack.c.l.b16 %v34
  %v63 = vunpack.c.l.b16 %v35
  %v64 = vunpack.c.l.b16 %v36
  %v65 = vpack.c.b16 %v58, %v57
  %v66 = vpack.c.b16 %v60, %v59
  %v67 = vpack.c.b16 %v62, %v61
  %v68 = vpack.c.b16 %v64, %v63
  %vm73 = vcmask 523264
  %v75 = vsel %vm73, %v48, 0
  %77 = vmatprep.subr.bf16.mxu0 0
  %78 = vmatpush1.bf16.msra.mxu0 0
  %79 = vmatprep.subr.bf16.mxu0 0
  %80 = vmatpush1.bf16.msra.mxu0 0
  %81 = vmatprep.subr.bf16.mxu0 0
  %82 = vmatpush1.bf16.msra.mxu0 0
  %83 = vmatprep.subr.bf16.mxu0 0
  %84 = vmatpush1.bf16.msra.mxu0 0
  %85 = vmatprep.subr.bf16.mxu0 0
  %86 = vmatpush1.bf16.msra.mxu0 %v68
  %87 = vmatprep.subr.bf16.mxu0 0
  %88 = vmatpush1.bf16.msra.mxu0 %v67
  %89 = vmatprep.subr.bf16.mxu0 0
  %90 = vmatpush1.bf16.msra.mxu0 %v66
  %91 = vmatprep.subr.bf16.mxu0 0
  %92 = vmatpush1.bf16.msra.mxu0 %v65
  %93 = vmatprep.subr.bf16.mxu0 0
  %94 = vmatpush2.bf16.msra.mxu0 0
  %95 = vmatprep.subr.bf16.mxu0 0
  %96 = vmatpush2.bf16.msra.mxu0 0
  %97 = vmatprep.subr.bf16.mxu0 0
  %98 = vmatpush2.bf16.msra.mxu0 0
  %99 = vmatprep.subr.bf16.mxu0 0
  %100 = vmatpush2.bf16.msra.mxu0 0
  %101 = vmatprep.subr.bf16.mxu0 0
  %102 = vmatpush2.bf16.msra.mxu0 0
  %103 = vmatprep.subr.bf16.mxu0 0
  %104 = vmatpush2.bf16.msra.mxu0 0
  %105 = vmatprep.subr.bf16.mxu0 0
  %106 = vmatpush2.bf16.msra.mxu0 0
  %107 = vmatprep.subr.bf16.mxu0 0
  %108 = vmatpush2.bf16.msra.mxu0 0
  %109 = vmatprep.mubr.bf16.mxu0 0
  %110 = vmatmul.mubr.bf16.gmra.mxu0 %v75
  %v111 = vpop.f32.mrf.mxu0
  %v112 = vadd.f32 %v42, %v111
  %v113 = vpop.f32.mrf.mxu0
  %v114 = vpop.f32.mrf.mxu0
  %v115 = vadd.f32 %v42, %v114
  %v116 = vpop.f32.mrf.mxu0
  %117 = vdwg.mxu0
  %v118 = vmax.f32 %v112, 0.0
  %v119 = vmax.f32 %v115, 0.0
  %v120 = vpack.c.bf16 %v119, %v118
  %v121 = vld [vmem:[%s3] sm:$0xf]
  %v122 = vld [vmem:[%s3 + $0x4] sm:$0xf]
  %v123 = vld [vmem:[%s3 + $0x8] sm:$0xf]
  %v124 = vld [vmem:[%s3 + $0xc] sm:$0xf]
  %v125 = vld [vmem:[%s3 + $0x10] sm:$0xf]
  %v126 = vld [vmem:[%s3 + $0x14] sm:$0xf]
  %v127 = vld [vmem:[%s3 + $0x18] sm:$0xf]
  %v128 = vld [vmem:[%s3 + $0x1c] sm:$0xf]
  %v129 = vld [vmem:[%s3 + $0x20] sm:$0xf]
  %v130 = vld [vmem:[%s3 + $0x24] sm:$0xf]
  %v131 = vld [vmem:[%s3 + $0x28] sm:$0xf]
  %v132 = vld [vmem:[%s3 + $0x2c] sm:$0xf]
  %v133 = vld [vmem:[%s3 + $0x30] sm:$0xf]
  %v134 = vld [vmem:[%s3 + $0x34] sm:$0xf]
  %v135 = vld [vmem:[%s3 + $0x38] sm:$0xf]
  %v136 = vld [vmem:[%s3 + $0x3c] sm:$0xf]
  %v137 = vld [vmem:[%s4] sm:$0x1]
  %v139 = vlaneseq
  %v140 = vshrl.u32 %v139, 7
  %v141 = vsub.s32 0, %v140
  %v142 = vrot.slane %v137, %v141
  %v160 = vunpack.c.l.b16 %v121
  %v161 = vunpack.c.l.b16 %v122
  %v162 = vunpack.c.l.b16 %v123
  %v163 = vunpack.c.l.b16 %v124
  %v164 = vunpack.c.l.b16 %v125
  %v165 = vunpack.c.l.b16 %v126
  %v166 = vunpack.c.l.b16 %v127
  %v167 = vunpack.c.l.b16 %v128
  %v168 = vunpack.c.l.b16 %v129
  %v169 = vunpack.c.l.b16 %v130
  %v170 = vunpack.c.l.b16 %v131
  %v171 = vunpack.c.l.b16 %v132
  %v172 = vunpack.c.l.b16 %v133
  %v173 = vunpack.c.l.b16 %v134
  %v174 = vunpack.c.l.b16 %v135
  %v175 = vunpack.c.l.b16 %v136
  %v176 = vpack.c.b16 %v161, %v160
  %v177 = vpack.c.b16 %v163, %v162
  %v178 = vpack.c.b16 %v165, %v164
  %v179 = vpack.c.b16 %v167, %v166
  %v180 = vpack.c.b16 %v169, %v168
  %v181 = vpack.c.b16 %v171, %v170
  %v182 = vpack.c.b16 %v173, %v172
  %v183 = vpack.c.b16 %v175, %v174
  %192 = vmatprep.subr.bf16.mxu0 0
  %193 = vmatpush1.bf16.msra.mxu0 %v183
  %194 = vmatprep.subr.bf16.mxu0 0
  %195 = vmatpush1.bf16.msra.mxu0 %v182
  %196 = vmatprep.subr.bf16.mxu0 0
  %197 = vmatpush1.bf16.msra.mxu0 %v181
  %198 = vmatprep.subr.bf16.mxu0 0
  %199 = vmatpush1.bf16.msra.mxu0 %v180
  %200 = vmatprep.subr.bf16.mxu0 0
  %201 = vmatpush1.bf16.msra.mxu0 %v179
  %202 = vmatprep.subr.bf16.mxu0 0
  %203 = vmatpush1.bf16.msra.mxu0 %v178
  %204 = vmatprep.subr.bf16.mxu0 0
  %205 = vmatpush1.bf16.msra.mxu0 %v177
  %206 = vmatprep.subr.bf16.mxu0 0
  %207 = vmatpush1.bf16.msra.mxu0 %v176
  %208 = vmatprep.subr.bf16.mxu0 0
  %209 = vmatpush2.bf16.msra.mxu0 0
  %210 = vmatprep.subr.bf16.mxu0 0
  %211 = vmatpush2.bf16.msra.mxu0 0
  %212 = vmatprep.subr.bf16.mxu0 0
  %213 = vmatpush2.bf16.msra.mxu0 0
  %214 = vmatprep.subr.bf16.mxu0 0
  %215 = vmatpush2.bf16.msra.mxu0 0
  %216 = vmatprep.subr.bf16.mxu0 0
  %217 = vmatpush2.bf16.msra.mxu0 0
  %218 = vmatprep.subr.bf16.mxu0 0
  %219 = vmatpush2.bf16.msra.mxu0 0
  %220 = vmatprep.subr.bf16.mxu0 0
  %221 = vmatpush2.bf16.msra.mxu0 0
  %222 = vmatprep.subr.bf16.mxu0 0
  %223 = vmatpush2.bf16.msra.mxu0 0
  %224 = vmatprep.mubr.bf16.mxu0 0
  %225 = vmatmul.mubr.bf16.gmra.mxu0 %v120
  %v226 = vpop.f32.mrf.mxu0
  %v227 = vadd.f32 %v142, %v226
  %v228 = vpop.f32.mrf.mxu0
  %v229 = vpop.f32.mrf.mxu0
  %v230 = vadd.f32 %v142, %v229
  %v231 = vpop.f32.mrf.mxu0
  %232 = vdwg.mxu0
  %v233 = vmax.f32 %v227, 0.0
  %v234 = vmax.f32 %v230, 0.0
  %v235 = vpack.c.bf16 %v234, %v233
  %v236 = vld [vmem:[%s5] sm:$0xf]
  %v237 = vld [vmem:[%s5 + $0x4] sm:$0xf]
  %v238 = vld [vmem:[%s5 + $0x8] sm:$0xf]
  %v239 = vld [vmem:[%s5 + $0xc] sm:$0xf]
  %v240 = vld [vmem:[%s5 + $0x10] sm:$0xf]
  %v241 = vld [vmem:[%s5 + $0x14] sm:$0xf]
  %v242 = vld [vmem:[%s5 + $0x18] sm:$0xf]
  %v243 = vld [vmem:[%s5 + $0x1c] sm:$0xf]
  %v244 = vld [vmem:[%s5 + $0x20] sm:$0xf]
  %v245 = vld [vmem:[%s5 + $0x24] sm:$0xf]
  %v246 = vld [vmem:[%s5 + $0x28] sm:$0xf]
  %v247 = vld [vmem:[%s5 + $0x2c] sm:$0xf]
  %v248 = vld [vmem:[%s5 + $0x30] sm:$0xf]
  %v249 = vld [vmem:[%s5 + $0x34] sm:$0xf]
  %v250 = vld [vmem:[%s5 + $0x38] sm:$0xf]
  %v251 = vld [vmem:[%s5 + $0x3c] sm:$0xf]
  %v252 = vld [vmem:[%s6] sm:$0x1]
  %v254 = vlaneseq
  %v255 = vshrl.u32 %v254, 7
  %v256 = vsub.s32 0, %v255
  %v257 = vrot.slane %v252, %v256
  %v275 = vunpack.c.l.b16 %v236
  %v276 = vunpack.c.l.b16 %v237
  %v277 = vunpack.c.l.b16 %v238
  %v278 = vunpack.c.l.b16 %v239
  %v279 = vunpack.c.l.b16 %v240
  %v280 = vunpack.c.l.b16 %v241
  %v281 = vunpack.c.l.b16 %v242
  %v282 = vunpack.c.l.b16 %v243
  %v283 = vunpack.c.l.b16 %v244
  %v284 = vunpack.c.l.b16 %v245
  %v285 = vunpack.c.l.b16 %v246
  %v286 = vunpack.c.l.b16 %v247
  %v287 = vunpack.c.l.b16 %v248
  %v288 = vunpack.c.l.b16 %v249
  %v289 = vunpack.c.l.b16 %v250
  %v290 = vunpack.c.l.b16 %v251
  %v291 = vpack.c.b16 %v276, %v275
  %v292 = vpack.c.b16 %v278, %v277
  %v293 = vpack.c.b16 %v280, %v279
  %v294 = vpack.c.b16 %v282, %v281
  %v295 = vpack.c.b16 %v284, %v283
  %v296 = vpack.c.b16 %v286, %v285
  %v297 = vpack.c.b16 %v288, %v287
  %v298 = vpack.c.b16 %v290, %v289
  %307 = vmatprep.subr.bf16.mxu0 0
  %308 = vmatpush1.bf16.msra.mxu0 %v298
  %309 = vmatprep.subr.bf16.mxu0 0
  %310 = vmatpush1.bf16.msra.mxu0 %v297
  %311 = vmatprep.subr.bf16.mxu0 0
  %312 = vmatpush1.bf16.msra.mxu0 %v296
  %313 = vmatprep.subr.bf16.mxu0 0
  %314 = vmatpush1.bf16.msra.mxu0 %v295
  %315 = vmatprep.subr.bf16.mxu0 0
  %316 = vmatpush1.bf16.msra.mxu0 %v294
  %317 = vmatprep.subr.bf16.mxu0 0
  %318 = vmatpush1.bf16.msra.mxu0 %v293
  %319 = vmatprep.subr.bf16.mxu0 0
  %320 = vmatpush1.bf16.msra.mxu0 %v292
  %321 = vmatprep.subr.bf16.mxu0 0
  %322 = vmatpush1.bf16.msra.mxu0 %v291
  %323 = vmatprep.subr.bf16.mxu0 0
  %324 = vmatpush2.bf16.msra.mxu0 0
  %325 = vmatprep.subr.bf16.mxu0 0
  %326 = vmatpush2.bf16.msra.mxu0 0
  %327 = vmatprep.subr.bf16.mxu0 0
  %328 = vmatpush2.bf16.msra.mxu0 0
  %329 = vmatprep.subr.bf16.mxu0 0
  %330 = vmatpush2.bf16.msra.mxu0 0
  %331 = vmatprep.subr.bf16.mxu0 0
  %332 = vmatpush2.bf16.msra.mxu0 0
  %333 = vmatprep.subr.bf16.mxu0 0
  %334 = vmatpush2.bf16.msra.mxu0 0
  %335 = vmatprep.subr.bf16.mxu0 0
  %336 = vmatpush2.bf16.msra.mxu0 0
  %337 = vmatprep.subr.bf16.mxu0 0
  %338 = vmatpush2.bf16.msra.mxu0 0
  %339 = vmatprep.mubr.bf16.mxu0 0
  %340 = vmatmul.mubr.bf16.gmra.mxu0 %v235
  %v341 = vpop.f32.mrf.mxu0
  %v342 = vadd.f32 %v257, %v341
  %v343 = vpop.f32.mrf.mxu0
  %v344 = vpop.f32.mrf.mxu0
  %v345 = vadd.f32 %v257, %v344
  %v346 = vpop.f32.mrf.mxu0
  %347 = vdwg.mxu0
  %v348 = vpack.c.bf16 %v345, %v342
  %v350 = vunpack.c.l.b16 %v348
  %v351 = vunpack.c.h.b16 %v348
  %v352 = vpack.c.b16 %v350, %v350
  %v353 = vpack.c.b16 %v351, %v351
  %356 = vst [vmem:[%s7] sm:$0xf] %v352
  %357 = vst [vmem:[%s7 + $0x4] sm:$0xf] %v353
  // Predicated region
  $region30: #{mlp_forward_pallas.1} parent=0 // pred_check
    _
  $region31: #{mlp_forward_pallas.1} parent=0 // pred_check_branch
    %359 = sbr.rel (0) target = $region33
  $region32: #{mlp_forward_pallas.1} parent=0 // pred_region
    _
  $region33: #{mlp_forward_pallas.1} parent=0 // pred_fallthru
    _
  // Predicated region
  $region34: #{mlp_forward_pallas.1} parent=0 // pred_check
    _
  $region35: #{mlp_forward_pallas.1} parent=0 // pred_check_branch
    %361 = sbr.rel (0) target = $region37
  $region36: #{mlp_forward_pallas.1} parent=0 // pred_region
    _
  $region37: #{mlp_forward_pallas.1} parent=0 // pred_fallthru
    _

</llo_original>
